<compile_context>
chip_gen: v7x
topology: tpu7x:2x2x1
jax: 0.10.0
libtpu: 0.0.40
codegen_flags: <defaults>
</compile_context>

<pallas_src>
import math

import jax
import jax.numpy as jnp
from jax.experimental import pallas as pl
from jax.experimental.pallas import tpu as pltpu


def positional_encoding_kernel(x_ref, pe_ref, o_ref):
    # x_ref / o_ref: (bb, ts, D) activation tile.  pe_ref: (ts, D) float32 tile
    # of the sin/cos table; batch-invariant, so broadcast over dim 0.
    x = x_ref[...].astype(jnp.float32)
    pe = pe_ref[...][None]                       # (1, ts, D), already float32
    o_ref[...] = (x + pe).astype(o_ref.dtype)


def make_pe_table(max_len, d_model):
    """The `pe` buffer from __init__ (float32, like the PyTorch buffer)."""
    position = jnp.arange(max_len, dtype=jnp.float32)[:, None]              # (L, 1)
    div_term = jnp.exp(jnp.arange(0, d_model, 2, dtype=jnp.float32)
                       * (-math.log(10000.0) / d_model))                    # (D/2,)
    angles = position * div_term                                            # (L, D/2)
    pe = jnp.zeros((max_len, d_model), dtype=jnp.float32)
    pe = pe.at[:, 0::2].set(jnp.sin(angles))
    pe = pe.at[:, 1::2].set(jnp.cos(angles))
    return pe


def _round_up(n, m):
    return ((n + m - 1) // m) * m


def positional_encoding(x, pe, *, target_tile_bytes=1 << 20):
    """x: (B, S, D).  pe: (max_len, D) float32 table.  Returns x + pe[:S]."""
    B, S, D = x.shape
    assert pe.shape[0] >= S and pe.shape[1] == D

    itemsize = x.dtype.itemsize
    # dtype-aware sublane quantum: 8 rows for f32, 16 for bf16, 32 for int8.
    sub = 8 * max(1, 4 // itemsize)

    # Rows per grid step targeting ~target_tile_bytes of x per step, so that
    # 2 buffers x (x + out + f32 pe) stays comfortably inside scoped VMEM even
    # on v5e (16 MiB default) while amortizing the per-step pipeline overhead.
    row_bytes = D * itemsize
    max_rows = max(sub, (target_tile_bytes // row_bytes) // sub * sub)

    # Seq tile: multiple of the sublane quantum; covers S outright when small.
    ts = min(_round_up(S, sub), max_rows)
    # Fold batch into the tile when a single seq tile is far below the target.
    bb = min(B, max(1, max_rows // ts))

    grid = (pl.cdiv(S, ts), pl.cdiv(B, bb))      # seq tiles outer, batch inner

    out = pl.pallas_call(
        positional_encoding_kernel,
        out_shape=jax.ShapeDtypeStruct((B, S, D), x.dtype),
        grid_spec=pltpu.PrefetchScalarGridSpec(
            num_scalar_prefetch=0,
            grid=grid,
            in_specs=[
                # x tile: ragged edges on batch/seq are masked by Pallas.
                pl.BlockSpec((bb, ts, D), lambda j, b: (b, j, 0)),
                # pe tile: index independent of the inner batch axis, so the
                # same block is reused (not re-DMA'd) across the batch loop.
                pl.BlockSpec((ts, D), lambda j, b: (j, 0)),
            ],
            out_specs=pl.BlockSpec((bb, ts, D), lambda j, b: (b, j, 0)),
        ),
        compiler_params=pltpu.CompilerParams(
            dimension_semantics=("parallel", "arbitrary")),
    )(x, pe)

    return out


def reference(x, pe):
    """Pure-JAX reference matching the PyTorch forward (dropout in eval mode)."""
    S = x.shape[1]
    return (x.astype(jnp.float32) + pe[:S].astype(jnp.float32)[None]).astype(x.dtype)


if __name__ == "__main__":
    # Small shapes consistent with the module: batch=2, seq=8, d_model=32.
    B, S, D = 2, 8, 32
    MAX_LEN = 5000

    key = jax.random.PRNGKey(0)
    x = jax.random.normal(key, (B, S, D), dtype=jnp.float32)

    # register_buffer('pe', ...) equivalent, built once outside the kernel.
    pe = make_pe_table(MAX_LEN, D)

    out = positional_encoding(x, pe)
    out = jax.block_until_ready(out)

    ref = reference(x, pe)
    assert out.shape == (B, S, D)
    assert jnp.allclose(out, ref, atol=1e-5, rtol=1e-5), "mismatch vs reference"

    print("KERNEL_OK")
</pallas_src>

<mosaic_0001>
module attributes {stable_mosaic.version = 11 : i64} {
  func.func @positional_encoding_kernel(%arg0: i32, %arg1: i32, %arg2: memref<2x8x32xf32, #tpu.memory_space<vmem>>, %arg3: memref<8x32xf32, #tpu.memory_space<vmem>>, %arg4: memref<2x8x32xf32, #tpu.memory_space<vmem>>) attributes {dimension_semantics = [#tpu.dimension_semantics<parallel>, #tpu.dimension_semantics<arbitrary>], iteration_bounds = array<i64: 1, 1>, scalar_prefetch = 0 : i64, scratch_operands = 0 : i64, tpu.core_type = #tpu.core_type<tc>, window_params = [{transform_indices = @transform_0, window_bounds = array<i64: 2, 8, 32>}, {transform_indices = @transform_1, window_bounds = array<i64: 8, 32>}, {transform_indices = @transform_2, window_bounds = array<i64: 2, 8, 32>}]} {
    %c0 = arith.constant 0 : index
    %c0_0 = arith.constant 0 : index
    %c0_1 = arith.constant 0 : index
    %0 = vector.load %arg2[%c0, %c0_0, %c0_1] : memref<2x8x32xf32, #tpu.memory_space<vmem>>, vector<2x8x32xf32>
    %c0_2 = arith.constant 0 : index
    %c0_3 = arith.constant 0 : index
    %1 = vector.load %arg3[%c0_2, %c0_3] : memref<8x32xf32, #tpu.memory_space<vmem>>, vector<8x32xf32>
    %2 = vector.shape_cast %1 : vector<8x32xf32> to vector<1x8x32xf32>
    %3 = vector.broadcast %2 : vector<1x8x32xf32> to vector<2x8x32xf32>
    %4 = arith.addf %0, %3 : vector<2x8x32xf32>
    %c0_4 = arith.constant 0 : index
    %c0_5 = arith.constant 0 : index
    %c0_6 = arith.constant 0 : index
    %5 = vector.load %arg4[%c0_4, %c0_5, %c0_6] : memref<2x8x32xf32, #tpu.memory_space<vmem>>, vector<2x8x32xf32>
    tpu.vector_store %arg4[%c0_4, %c0_5, %c0_6], %4 {strides = array<i32>} : memref<2x8x32xf32, #tpu.memory_space<vmem>>, vector<2x8x32xf32>,
    return
  }
  func.func @transform_0(%arg0: i32, %arg1: i32) -> (i32, i32, i32) {
    %c0_i32 = arith.constant 0 : i32
    %c0_i32_0 = arith.constant 0 : i32
    return %arg1, %arg0, %c0_i32 : i32, i32, i32
  }
  func.func @transform_1(%arg0: i32, %arg1: i32) -> (i32, i32) {
    %c0_i32 = arith.constant 0 : i32
    %c0_i32_0 = arith.constant 0 : i32
    return %arg0, %c0_i32 : i32, i32
  }
  func.func @transform_2(%arg0: i32, %arg1: i32) -> (i32, i32, i32) {
    %c0_i32 = arith.constant 0 : i32
    %c0_i32_0 = arith.constant 0 : i32
    return %arg1, %arg0, %c0_i32 : i32, i32, i32
  }
}

</mosaic_0001>

<llo_original>
// kernel: tpu_custom_call.1
$region0: #{tpu_custom_call.1}
  #allocation0 [shape = 'u32[]', space=smem, size = 0x4, offset = 0x4, fixed_abs, tag = 'smem constant byte address 0x4 - core index']
  #allocation1 [shape = 'u32[144,128]{1,0:T(1,128)}', space=vmem, size = 0x12000, scoped, tag = 'internal scratch']
  %s0 = inlined_call_operand.vmem [shape: f32[2,8,32], index: 0, kind: input, shape index: {}]
  %s1 = inlined_call_operand.vmem [shape: f32[5000,32], index: 1, kind: input, shape index: {}]
  %s2 = inlined_call_operand.hbm [shape: f32[2,8,32], index: 2, kind: output, shape index: {}]
  %s3 = sld [smem:[#allocation0]]
  $region18: #{tpu_custom_call.1} parent=0
    _
  %s5 = ssub.s32 1, %s3
  %s6 = scalar_select 0, %s5, %s3
  $region1: #{tpu_custom_call.1} parent=0
    #allocation2 [shape = 'u8[8192]{0}', space=vmem, size = 0x2000, scoped, tag = 'output window, operand 0, single buffered']
    #allocation3 [shape = 's32[1]{0}', space=sflag, size = 0x4, scoped, tag = 'scoped memory for tpu_custom_call.1']
    %7 = vsyncpa [#allocation3], 0
    // Predicated region
    $region2: #{tpu_custom_call.1} parent=1 // pred_check
      _
    $region3: #{tpu_custom_call.1} parent=1 // pred_check_branch
      %9 = sbr.rel (0) target = $region5
    $region4: #{tpu_custom_call.1} parent=1 // pred_region
      _
    $region5: #{tpu_custom_call.1} parent=1 // pred_fallthru
      _
    // Predicated region
    $region6: #{tpu_custom_call.1} parent=1 // pred_check
      _
    $region7: #{tpu_custom_call.1} parent=1 // pred_check_branch
      %11 = sbr.rel (0) target = $region9
    $region8: #{tpu_custom_call.1} parent=1 // pred_region
      _
    $region9: #{tpu_custom_call.1} parent=1 // pred_fallthru
      _
    %v12 = vld [vmem:[%s0] sm:$0xff]
    %v13 = vld [vmem:[%s0 + $0x8] sm:$0xff]
    %v14 = vld [vmem:[%s1] sm:$0xff]
    %v15 = vadd.f32 %v12, %v14
    %v16 = vadd.f32 %v13, %v14
    %vm17 = vcmask 261120
    %18 = vst.msk [vmem:[#allocation2] sm:$0xff] %vm17, %v15
    %19 = vst.msk [vmem:[#allocation2 + $0x8] sm:$0xff] %vm17, %v16
    // Predicated region
    $region10: #{tpu_custom_call.1} parent=1 // pred_check
      _
    $region11: #{tpu_custom_call.1} parent=1 // pred_check_branch
      %21 = sbr.rel (0) target = $region13
    $region12: #{tpu_custom_call.1} parent=1 // pred_region
      %s23 = ssub.s32 256, 256
      %24 = vsyncadd [#allocation3], %s23
      %s25 = sshll.u32 [#allocation2], 4
      %s26 = int_to_ptr.vmem [resolvable:$true] %s25
      %31 = dma.vmem_to_hbm [thread:$0]  %s26, 256, %s2, [#allocation3], 128, 128, 8
    $region13: #{tpu_custom_call.1} parent=1 // pred_fallthru
      _
    // Predicated region
    $region14: #{tpu_custom_call.1} parent=1 // pred_check
      _
    $region15: #{tpu_custom_call.1} parent=1 // pred_check_branch
      %33 = sbr.rel (0) target = $region17
    $region16: #{tpu_custom_call.1} parent=1 // pred_region
      %34 = dma.done [#allocation3], 256
    $region17: #{tpu_custom_call.1} parent=1 // pred_fallthru
      _
    %35 = vsyncpa [#allocation3], 1

</llo_original>
